<compile_context>
chip_gen: v6e
topology: v6e:2x2x1
jax: 0.10.0
libtpu: 0.0.40
codegen_flags: <defaults>
</compile_context>

<pallas_src>
import functools

import jax
import jax.numpy as jnp
from jax.experimental import pallas as pl
from jax.experimental.pallas import tpu as pltpu

LN_EPS = 1e-5
# TODO(synk): torch module uses eps=1e-12 in f64; 1e-12 is below f32 resolution
#             and does not regularize the zeta denominators, so the f32 kernel
#             (and its reference) use 1e-6 instead.
ZETA_EPS = 1e-6


def _fast_sigmoid(z):
    """sigmoid via EUP exp + approximate EUP reciprocal (frees VALU slots)."""
    return pl.reciprocal(1.0 + jnp.exp(-z), approx=True)


def primal_net_kernel(
    x_ref,
    n2g_ref, n2g_t_ref, lfm_t_ref,
    ln_g_ref, ln_b_ref,
    w0_ref, b0_ref, w1_ref, b1_ref, wh_ref, bh_ref,
    out_ref,
    *, n_nodes, n_gens, n_lines,
):
    f32 = jnp.float32
    bf16 = jnp.bfloat16
    N, G, L = n_nodes, n_gens, n_lines

    # ---- single HBM read per batch row: slice demand / bounds out of x ----
    # x = [D | p_lb | p_ub | f_lb | f_ub | md_lb | md_ub]
    x = x_ref[...]
    d_nt = x[:, :N]
    p_lb = x[:, N:N + G]
    p_ub = x[:, N + G:N + 2 * G]
    f_lb = x[:, N + 2 * G:N + 2 * G + L]
    f_ub = x[:, N + 2 * G + L:N + 2 * G + 2 * L]
    # md bound columns are only consumed by the LayerNorm below.

    # ---- FeedForwardNet: LayerNorm (one-pass stats) -> (Linear,ReLU)x2 -> head ----
    mu = jnp.mean(x, axis=-1, keepdims=True)
    ms = jnp.mean(x * x, axis=-1, keepdims=True)
    var = jnp.maximum(ms - mu * mu, 0.0)       # guard tiny negatives from cancellation
    xn = (x - mu) * jax.lax.rsqrt(var + LN_EPS)
    xn = xn * ln_g_ref[...] + ln_b_ref[...]

    h = jnp.dot(xn.astype(bf16), w0_ref[...], preferred_element_type=f32) + b0_ref[...]
    h = jnp.maximum(h, 0.0)
    h = jnp.dot(h.astype(bf16), w1_ref[...], preferred_element_type=f32) + b1_ref[...]
    h = jnp.maximum(h, 0.0)
    head = jnp.dot(h.astype(bf16), wh_ref[...], preferred_element_type=f32) + bh_ref[...]

    p_raw = head[:, :G]
    f_raw = head[:, G:G + L]

    # ---- BoundRepairLayer (k = 1.0), f32 elementwise ----
    p_gt = p_lb + (p_ub - p_lb) * _fast_sigmoid(p_raw)
    fl_lb = -f_lb                                  # module passes -f_lt_lb as lower bound
    f_lt = fl_lb + (f_ub - fl_lb) * _fast_sigmoid(f_raw)

    # ---- Power-balance repair (bf16 MXU operands, f32 accumulation) ----
    tb = x.shape[0]

    net_flow = jnp.dot(f_lt.astype(bf16), lfm_t_ref[...],
                       preferred_element_type=f32)                        # [TB, N]

    # one [3*TB, G] @ [G, N] matmul instead of 3 tiny ones
    p_stack = jnp.concatenate([p_lb, p_ub, p_gt], axis=0).astype(bf16)
    caps = jnp.dot(p_stack, n2g_t_ref[...], preferred_element_type=f32)   # [3*TB, N]
    cap_lb = caps[:tb]
    cap_ub = caps[tb:2 * tb]
    tot_gen = caps[2 * tb:]

    updated_demand = d_nt - net_flow
    d_clamped = jnp.clip(updated_demand, cap_lb, cap_ub)

    mask_up = (tot_gen < d_clamped).astype(f32)
    zeta_up = (d_clamped - tot_gen) * pl.reciprocal(cap_ub - tot_gen + ZETA_EPS,
                                                    approx=True)
    zeta_dn = (tot_gen - d_clamped) * pl.reciprocal(tot_gen - cap_lb + ZETA_EPS,
                                                    approx=True)

    # one [3*TB, N] @ [N, G] matmul instead of 3 tiny ones
    z_stack = jnp.concatenate([mask_up, zeta_up, zeta_dn], axis=0).astype(bf16)
    zg = jnp.dot(z_stack, n2g_ref[...], preferred_element_type=f32)       # [3*TB, G]
    mask_up_g = zg[:tb]
    zeta_up_g = zg[tb:2 * tb]
    zeta_dn_g = zg[2 * tb:]

    p_gt = jnp.where(
        mask_up_g != 0.0,
        (1.0 - zeta_up_g) * p_gt + zeta_up_g * p_ub,
        (1.0 - zeta_dn_g) * p_gt + zeta_dn_g * p_lb,
    )

    # ---- output [p_gt | f_lt | md_nt]: head already has the [p|f|md] column
    #      order, so store it and overwrite only the repaired sections (no
    #      second full-width lane-concat buffer; md_nt is never copied). ----
    out_ref[...] = head
    out_ref[:, :G] = p_gt
    out_ref[:, G:G + L] = f_lt


def prepare_params(params, masks):
    """One-time (per model) preprocessing: fuse the three head weights into one
    [hidden, G+L+N] matrix, cast MXU operands (dense weights AND incidence
    masks) to bf16, pre-transpose the static masks.  Masks are exactly 0/±1,
    so bf16 is lossless for them."""
    n2g, lfm = masks
    f32, bf16 = jnp.float32, jnp.bfloat16
    w_head = jnp.concatenate([params["wp"], params["wf"], params["wmd"]], axis=1)
    b_head = jnp.concatenate([params["bp"], params["bf"], params["bmd"]], axis=1)
    return dict(
        ln_g=params["ln_g"].astype(f32), ln_b=params["ln_b"].astype(f32),
        w0=params["w0"].astype(bf16), b0=params["b0"].astype(f32),
        w1=params["w1"].astype(bf16), b1=params["b1"].astype(f32),
        w_head=w_head.astype(bf16), b_head=b_head.astype(f32),
        n2g=n2g.astype(bf16), n2g_t=n2g.T.astype(bf16), lfm_t=lfm.T.astype(bf16),
    )


def primal_net_forward(x, prep, dims, tile_b=512):
    """Single gridded pallas_call over the batch; x is the only per-row input
    (split_X / split_ineq_constraints happen in-kernel as lane slices)."""
    N, G, L = dims
    B, xdim = x.shape
    hidden = prep["w0"].shape[1]
    out_dim = G + L + N

    # Batch tile: multiple of 8 (f32 sublane).  Default 512 (bigger tiles get
    # closer to HBM roofline and amortize the ~0.35us/step grid overhead);
    # halve it when one step would swallow the batch so both v7x TCs get work.
    tile_b = min(tile_b, B)
    if tile_b >= B and B >= 16:
        tile_b = (B + 1) // 2
    tile_b = max(8, (tile_b // 8) * 8)
    grid = (pl.cdiv(B, tile_b),)

    resident_inputs = (
        prep["n2g"], prep["n2g_t"], prep["lfm_t"],
        prep["ln_g"], prep["ln_b"],
        prep["w0"], prep["b0"], prep["w1"], prep["b1"],
        prep["w_head"], prep["b_head"],
    )
    in_specs = (
        # NOTE: add pipeline_mode=pl.Buffered(3) here if a profile shows
        # exposed input DMA after the dedup + larger tiles.
        [pl.BlockSpec((tile_b, xdim), lambda i: (i, 0))]
        + [pl.BlockSpec(a.shape, lambda i: (0, 0)) for a in resident_inputs]
    )

    flops = 2 * B * (xdim * hidden + hidden * hidden + hidden * out_dim
                     + L * N + 3 * G * N + 3 * N * G)
    transcendentals = B * (2 * (G + L) + 2 * N + 1)   # sigmoids (exp+rcp), zeta rcps, rsqrt
    bytes_accessed = int(
        4 * B * (xdim + out_dim)                                      # deduped batch I/O
        + 2 * (xdim * hidden + hidden * hidden + hidden * out_dim)    # bf16 weights
        + 2 * (2 * N * G + N * L)                                     # bf16 masks
        + 4 * (2 * xdim + 2 * hidden + out_dim))                      # ln params + biases

    kernel = functools.partial(primal_net_kernel, n_nodes=N, n_gens=G, n_lines=L)
    return pl.pallas_call(
        kernel,
        grid=grid,
        in_specs=in_specs,
        out_specs=pl.BlockSpec((tile_b, out_dim), lambda i: (i, 0)),
        out_shape=jax.ShapeDtypeStruct((B, out_dim), jnp.float32),
        compiler_params=pltpu.CompilerParams(
            dimension_semantics=("parallel",),
            # 48 MiB leaves headroom on v7x (64 MiB physical); v5e/v6e (128 MiB)
            # could go higher together with a larger tile_b.
            vmem_limit_bytes=48 * 1024 * 1024),
        cost_estimate=pl.CostEstimate(
            flops=int(flops),
            transcendentals=int(transcendentals),
            bytes_accessed=bytes_accessed),
    )(x, *resident_inputs)


def reference_forward(x, prep, dims):
    """Pure-JAX reference mirroring the PyTorch forward semantics with the same
    numeric scheme as the kernel (bf16 MXU operands incl. masks, f32 accumulation,
    f32 elementwise repair math, same ZETA_EPS).  Only the kernel's approximate
    EUP reciprocals (sigmoid + zeta) differ.
    TODO(synk): torch module runs float64 on CPU; no f64 path on the TPU MXU."""
    f32, bf16 = jnp.float32, jnp.bfloat16
    N, G, L = dims
    D = x[:, :N]
    p_lb = x[:, N:N + G]
    p_ub = x[:, N + G:N + 2 * G]
    f_lb = x[:, N + 2 * G:N + 2 * G + L]
    f_ub = x[:, N + 2 * G + L:N + 2 * G + 2 * L]

    mu = jnp.mean(x, axis=-1, keepdims=True)
    ms = jnp.mean(x * x, axis=-1, keepdims=True)
    var = jnp.maximum(ms - mu * mu, 0.0)
    xn = (x - mu) * jax.lax.rsqrt(var + LN_EPS) * prep["ln_g"] + prep["ln_b"]
    h = jnp.maximum(jnp.dot(xn.astype(bf16), prep["w0"], preferred_element_type=f32)
                    + prep["b0"], 0.0)
    h = jnp.maximum(jnp.dot(h.astype(bf16), prep["w1"], preferred_element_type=f32)
                    + prep["b1"], 0.0)
    head = (jnp.dot(h.astype(bf16), prep["w_head"], preferred_element_type=f32)
            + prep["b_head"])
    p_raw, f_raw, md = head[:, :G], head[:, G:G + L], head[:, G + L:]

    p = p_lb + (p_ub - p_lb) * jax.nn.sigmoid(p_raw)
    f = (-f_lb) + (f_ub - (-f_lb)) * jax.nn.sigmoid(f_raw)

    net_flow = jnp.dot(f.astype(bf16), prep["lfm_t"], preferred_element_type=f32)
    upd = D - net_flow
    cap_lb = jnp.dot(p_lb.astype(bf16), prep["n2g_t"], preferred_element_type=f32)
    cap_ub = jnp.dot(p_ub.astype(bf16), prep["n2g_t"], preferred_element_type=f32)
    dcl = jnp.clip(upd, cap_lb, cap_ub)
    tg = jnp.dot(p.astype(bf16), prep["n2g_t"], preferred_element_type=f32)
    mask_up = (tg < dcl).astype(f32)
    zu = (dcl - tg) / (cap_ub - tg + ZETA_EPS)
    zd = (tg - dcl) / (tg - cap_lb + ZETA_EPS)
    mask_up = jnp.dot(mask_up.astype(bf16), prep["n2g"], preferred_element_type=f32)
    zu = jnp.dot(zu.astype(bf16), prep["n2g"], preferred_element_type=f32)
    zd = jnp.dot(zd.astype(bf16), prep["n2g"], preferred_element_type=f32)
    p = jnp.where(mask_up != 0.0, (1 - zu) * p + zu * p_ub, (1 - zd) * p + zd * p_lb)
    return jnp.concatenate([p, f, md], axis=1)


if __name__ == "__main__":
    key = jax.random.PRNGKey(0)
    B, N, G, L = 8, 8, 8, 8                      # batch, nodes, generators, lines
    xdim = N + 2 * G + 2 * L + 2 * N             # eq_rhs (demand) + ineq_rhs bounds = 56
    hidden = 2 * xdim                            # hidden_size_factor = 2
    out_dim = G + L + N

    ks = jax.random.split(key, 13)

    # ---- synthetic problem data (x = [D | p_lb | p_ub | f_lb | f_ub | md_lb | md_ub]) ----
    D = jax.random.uniform(ks[0], (B, N), jnp.float32, 0.5, 2.0)
    p_lb = jax.random.uniform(ks[1], (B, G), jnp.float32, 0.0, 0.5)
    p_ub = p_lb + jax.random.uniform(ks[2], (B, G), jnp.float32, 0.5, 1.5)
    f_lb = jax.random.uniform(ks[3], (B, L), jnp.float32, 0.2, 1.0)
    f_ub = jax.random.uniform(ks[4], (B, L), jnp.float32, 0.2, 1.0)
    md_lb = jax.random.uniform(ks[5], (B, N), jnp.float32, 0.0, 0.1)
    md_ub = md_lb + jax.random.uniform(ks[6], (B, N), jnp.float32, 0.1, 0.5)
    x = jnp.concatenate([D, p_lb, p_ub, f_lb, f_ub, md_lb, md_ub], axis=1)

    # node_to_gen_mask [N, G]: generator g attached to node g % N
    n2g = jnp.zeros((N, G), jnp.float32).at[jnp.arange(G) % N, jnp.arange(G)].set(1.0)
    # lineflow_mask [N, L]: line l from node l to node (l+1) % N (incidence)
    lfm = jnp.zeros((N, L), jnp.float32)
    lfm = lfm.at[jnp.arange(L) % N, jnp.arange(L)].set(1.0)
    lfm = lfm.at[(jnp.arange(L) + 1) % N, jnp.arange(L)].add(-1.0)

    # ---- deterministic parameter init (kaiming_normal_ weights, default Linear bias) ----
    def kaiming(k, fan_in, fan_out):
        return jax.random.normal(k, (fan_in, fan_out), jnp.float32) * jnp.sqrt(2.0 / fan_in)

    def bias(k, fan_in, fan_out):
        bound = 1.0 / jnp.sqrt(float(fan_in))
        return jax.random.uniform(k, (1, fan_out), jnp.float32, -bound, bound)

    w_last = kaiming(ks[7], hidden, out_dim)
    b_last = bias(ks[8], hidden, out_dim)
    params = dict(
        ln_g=jnp.ones((1, xdim), jnp.float32),
        ln_b=jnp.zeros((1, xdim), jnp.float32),
        w0=kaiming(ks[9], xdim, hidden), b0=bias(ks[10], xdim, hidden),
        w1=kaiming(ks[11], hidden, hidden), b1=bias(ks[12], hidden, hidden),
        wp=w_last[:, :G], bp=b_last[:, :G],
        wf=w_last[:, G:G + L], bf=b_last[:, G:G + L],
        wmd=w_last[:, G + L:], bmd=b_last[:, G + L:],
    )

    prep = prepare_params(params, (n2g, lfm))    # one-time model setup

    y = primal_net_forward(x, prep, (N, G, L))
    y = jax.block_until_ready(y)

    y_ref = reference_forward(x, prep, (N, G, L))
    assert y.shape == (B, out_dim), y.shape
    # tolerance covers the kernel-only approximate EUP reciprocals (sigmoid and
    # zeta divides), bf16 MXU operands, and Mosaic-vs-XLA accumulation rounding
    assert jnp.allclose(y, y_ref, atol=1e-2, rtol=1e-2), float(jnp.max(jnp.abs(y - y_ref)))

    print("KERNEL_OK")
</pallas_src>

<mosaic_0001>
module attributes {stable_mosaic.version = 11 : i64} {
  func.func @primal_net_kernel(%arg0: i32, %arg1: memref<8x56xf32, #tpu.memory_space<vmem>>, %arg2: memref<8x8xbf16, #tpu.memory_space<vmem>>, %arg3: memref<8x8xbf16, #tpu.memory_space<vmem>>, %arg4: memref<8x8xbf16, #tpu.memory_space<vmem>>, %arg5: memref<1x56xf32, #tpu.memory_space<vmem>>, %arg6: memref<1x56xf32, #tpu.memory_space<vmem>>, %arg7: memref<56x112xbf16, #tpu.memory_space<vmem>>, %arg8: memref<1x112xf32, #tpu.memory_space<vmem>>, %arg9: memref<112x112xbf16, #tpu.memory_space<vmem>>, %arg10: memref<1x112xf32, #tpu.memory_space<vmem>>, %arg11: memref<112x24xbf16, #tpu.memory_space<vmem>>, %arg12: memref<1x24xf32, #tpu.memory_space<vmem>>, %arg13: memref<8x24xf32, #tpu.memory_space<vmem>>) attributes {dimension_semantics = [#tpu.dimension_semantics<parallel>], iteration_bounds = array<i64: 1>, scalar_prefetch = 0 : i64, scratch_operands = 0 : i64, tpu.core_type = #tpu.core_type<tc>, window_params = [{transform_indices = @transform_0, window_bounds = array<i64: 8, 56>}, {pipeline_mode = #tpu.pipeline_mode<synchronous>, transform_indices = @transform_1, window_bounds = array<i64: 8, 8>}, {pipeline_mode = #tpu.pipeline_mode<synchronous>, transform_indices = @transform_2, window_bounds = array<i64: 8, 8>}, {pipeline_mode = #tpu.pipeline_mode<synchronous>, transform_indices = @transform_3, window_bounds = array<i64: 8, 8>}, {pipeline_mode = #tpu.pipeline_mode<synchronous>, transform_indices = @transform_4, window_bounds = array<i64: 1, 56>}, {pipeline_mode = #tpu.pipeline_mode<synchronous>, transform_indices = @transform_5, window_bounds = array<i64: 1, 56>}, {pipeline_mode = #tpu.pipeline_mode<synchronous>, transform_indices = @transform_6, window_bounds = array<i64: 56, 112>}, {pipeline_mode = #tpu.pipeline_mode<synchronous>, transform_indices = @transform_7, window_bounds = array<i64: 1, 112>}, {pipeline_mode = #tpu.pipeline_mode<synchronous>, transform_indices = @transform_8, window_bounds = array<i64: 112, 112>}, {pipeline_mode = #tpu.pipeline_mode<synchronous>, transform_indices = @transform_9, window_bounds = array<i64: 1, 112>}, {pipeline_mode = #tpu.pipeline_mode<synchronous>, transform_indices = @transform_10, window_bounds = array<i64: 112, 24>}, {pipeline_mode = #tpu.pipeline_mode<synchronous>, transform_indices = @transform_11, window_bounds = array<i64: 1, 24>}, {transform_indices = @transform_12, window_bounds = array<i64: 8, 24>}]} {
    %c0 = arith.constant 0 : index
    %c0_0 = arith.constant 0 : index
    %0 = vector.load %arg1[%c0, %c0_0] : memref<8x56xf32, #tpu.memory_space<vmem>>, vector<8x56xf32>
    %1 = vector.extract_strided_slice %0 {offsets = [0, 0], sizes = [8, 8], strides = [1, 1]} : vector<8x56xf32> to vector<8x8xf32>
    %2 = vector.extract_strided_slice %0 {offsets = [0, 8], sizes = [8, 8], strides = [1, 1]} : vector<8x56xf32> to vector<8x8xf32>
    %3 = vector.extract_strided_slice %0 {offsets = [0, 16], sizes = [8, 8], strides = [1, 1]} : vector<8x56xf32> to vector<8x8xf32>
    %4 = vector.extract_strided_slice %0 {offsets = [0, 24], sizes = [8, 8], strides = [1, 1]} : vector<8x56xf32> to vector<8x8xf32>
    %5 = vector.extract_strided_slice %0 {offsets = [0, 32], sizes = [8, 8], strides = [1, 1]} : vector<8x56xf32> to vector<8x8xf32>
    %cst = arith.constant dense<0.000000e+00> : vector<8xf32>
    %6 = vector.multi_reduction <add>, %0, %cst [1] : vector<8x56xf32> to vector<8xf32>
    %7 = vector.shape_cast %6 : vector<8xf32> to vector<8x1xf32>
    %cst_1 = arith.constant 5.600000e+01 : f32
    %8 = vector.broadcast %cst_1 : f32 to vector<8x1xf32>
    %9 = arith.divf %7, %8 : vector<8x1xf32>
    %10 = arith.mulf %0, %0 : vector<8x56xf32>
    %cst_2 = arith.constant dense<0.000000e+00> : vector<8xf32>
    %11 = vector.multi_reduction <add>, %10, %cst_2 [1] : vector<8x56xf32> to vector<8xf32>
    %12 = vector.shape_cast %11 : vector<8xf32> to vector<8x1xf32>
    %cst_3 = arith.constant 5.600000e+01 : f32
    %13 = vector.broadcast %cst_3 : f32 to vector<8x1xf32>
    %14 = arith.divf %12, %13 : vector<8x1xf32>
    %15 = arith.mulf %9, %9 : vector<8x1xf32>
    %16 = arith.subf %14, %15 : vector<8x1xf32>
    %cst_4 = arith.constant 0.000000e+00 : f32
    %17 = vector.broadcast %cst_4 : f32 to vector<8x1xf32>
    %18 = arith.maximumf %16, %17 : vector<8x1xf32>
    %19 = vector.broadcast %9 : vector<8x1xf32> to vector<8x56xf32>
    %20 = arith.subf %0, %19 : vector<8x56xf32>
    %cst_5 = arith.constant 9.99999974E-6 : f32
    %21 = vector.broadcast %cst_5 : f32 to vector<8x1xf32>
    %22 = arith.addf %18, %21 : vector<8x1xf32>
    %23 = math.rsqrt %22 : vector<8x1xf32>
    %24 = vector.broadcast %23 : vector<8x1xf32> to vector<8x56xf32>
    %25 = arith.mulf %20, %24 : vector<8x56xf32>
    %c0_6 = arith.constant 0 : index
    %c0_7 = arith.constant 0 : index
    %26 = vector.load %arg5[%c0_6, %c0_7] : memref<1x56xf32, #tpu.memory_space<vmem>>, vector<1x56xf32>
    %27 = vector.broadcast %26 : vector<1x56xf32> to vector<8x56xf32>
    %28 = arith.mulf %25, %27 : vector<8x56xf32>
    %c0_8 = arith.constant 0 : index
    %c0_9 = arith.constant 0 : index
    %29 = vector.load %arg6[%c0_8, %c0_9] : memref<1x56xf32, #tpu.memory_space<vmem>>, vector<1x56xf32>
    %30 = vector.broadcast %29 : vector<1x56xf32> to vector<8x56xf32>
    %31 = arith.addf %28, %30 : vector<8x56xf32>
    %32 = arith.truncf %31 : vector<8x56xf32> to vector<8x56xbf16>
    %c0_10 = arith.constant 0 : index
    %c0_11 = arith.constant 0 : index
    %33 = vector.load %arg7[%c0_10, %c0_11] : memref<56x112xbf16, #tpu.memory_space<vmem>>, vector<56x112xbf16>
    %cst_12 = arith.constant dense<0.000000e+00> : vector<8x112xf32>
    %34 = tpu.matmul %32, %33, %cst_12 {dimension_numbers = #tpu.dot_dimension_numbers<[1], [0], [0], [1], [0, 0, 1, 1], [], []>} : vector<8x56xbf16>, vector<56x112xbf16>, vector<8x112xf32> -> vector<8x112xf32>
    %c0_13 = arith.constant 0 : index
    %c0_14 = arith.constant 0 : index
    %35 = vector.load %arg8[%c0_13, %c0_14] : memref<1x112xf32, #tpu.memory_space<vmem>>, vector<1x112xf32>
    %36 = vector.broadcast %35 : vector<1x112xf32> to vector<8x112xf32>
    %37 = arith.addf %34, %36 : vector<8x112xf32>
    %cst_15 = arith.constant 0.000000e+00 : f32
    %38 = vector.broadcast %cst_15 : f32 to vector<8x112xf32>
    %39 = arith.maximumf %37, %38 : vector<8x112xf32>
    %40 = arith.truncf %39 : vector<8x112xf32> to vector<8x112xbf16>
    %c0_16 = arith.constant 0 : index
    %c0_17 = arith.constant 0 : index
    %41 = vector.load %arg9[%c0_16, %c0_17] : memref<112x112xbf16, #tpu.memory_space<vmem>>, vector<112x112xbf16>
    %cst_18 = arith.constant dense<0.000000e+00> : vector<8x112xf32>
    %42 = tpu.matmul %40, %41, %cst_18 {dimension_numbers = #tpu.dot_dimension_numbers<[1], [0], [0], [1], [0, 0, 1, 1], [], []>} : vector<8x112xbf16>, vector<112x112xbf16>, vector<8x112xf32> -> vector<8x112xf32>
    %c0_19 = arith.constant 0 : index
    %c0_20 = arith.constant 0 : index
    %43 = vector.load %arg10[%c0_19, %c0_20] : memref<1x112xf32, #tpu.memory_space<vmem>>, vector<1x112xf32>
    %44 = vector.broadcast %43 : vector<1x112xf32> to vector<8x112xf32>
    %45 = arith.addf %42, %44 : vector<8x112xf32>
    %cst_21 = arith.constant 0.000000e+00 : f32
    %46 = vector.broadcast %cst_21 : f32 to vector<8x112xf32>
    %47 = arith.maximumf %45, %46 : vector<8x112xf32>
    %48 = arith.truncf %47 : vector<8x112xf32> to vector<8x112xbf16>
    %c0_22 = arith.constant 0 : index
    %c0_23 = arith.constant 0 : index
    %49 = vector.load %arg11[%c0_22, %c0_23] : memref<112x24xbf16, #tpu.memory_space<vmem>>, vector<112x24xbf16>
    %cst_24 = arith.constant dense<0.000000e+00> : vector<8x24xf32>
    %50 = tpu.matmul %48, %49, %cst_24 {dimension_numbers = #tpu.dot_dimension_numbers<[1], [0], [0], [1], [0, 0, 1, 1], [], []>} : vector<8x112xbf16>, vector<112x24xbf16>, vector<8x24xf32> -> vector<8x24xf32>
    %c0_25 = arith.constant 0 : index
    %c0_26 = arith.constant 0 : index
    %51 = vector.load %arg12[%c0_25, %c0_26] : memref<1x24xf32, #tpu.memory_space<vmem>>, vector<1x24xf32>
    %52 = vector.broadcast %51 : vector<1x24xf32> to vector<8x24xf32>
    %53 = arith.addf %50, %52 : vector<8x24xf32>
    %54 = vector.extract_strided_slice %53 {offsets = [0, 0], sizes = [8, 8], strides = [1, 1]} : vector<8x24xf32> to vector<8x8xf32>
    %55 = vector.extract_strided_slice %53 {offsets = [0, 8], sizes = [8, 8], strides = [1, 1]} : vector<8x24xf32> to vector<8x8xf32>
    %56 = arith.subf %3, %2 : vector<8x8xf32>
    %cst_27 = arith.constant 0.000000e+00 : f32
    %57 = vector.broadcast %cst_27 : f32 to vector<8x8xf32>
    %58 = arith.subf %57, %54 : vector<8x8xf32>
    %59 = math.exp %58 : vector<8x8xf32>
    %cst_28 = arith.constant 1.000000e+00 : f32
    %60 = vector.broadcast %cst_28 : f32 to vector<8x8xf32>
    %61 = arith.addf %60, %59 : vector<8x8xf32>
    %62 = tpu.reciprocal %61 {approx = true} : vector<8x8xf32> -> vector<8x8xf32>
    %63 = arith.mulf %56, %62 : vector<8x8xf32>
    %64 = arith.addf %2, %63 : vector<8x8xf32>
    %cst_29 = arith.constant 0.000000e+00 : f32
    %65 = vector.broadcast %cst_29 : f32 to vector<8x8xf32>
    %66 = arith.subf %65, %4 : vector<8x8xf32>
    %67 = arith.subf %5, %66 : vector<8x8xf32>
    %cst_30 = arith.constant 0.000000e+00 : f32
    %68 = vector.broadcast %cst_30 : f32 to vector<8x8xf32>
    %69 = arith.subf %68, %55 : vector<8x8xf32>
    %70 = math.exp %69 : vector<8x8xf32>
    %cst_31 = arith.constant 1.000000e+00 : f32
    %71 = vector.broadcast %cst_31 : f32 to vector<8x8xf32>
    %72 = arith.addf %71, %70 : vector<8x8xf32>
    %73 = tpu.reciprocal %72 {approx = true} : vector<8x8xf32> -> vector<8x8xf32>
    %74 = arith.mulf %67, %73 : vector<8x8xf32>
    %75 = arith.addf %66, %74 : vector<8x8xf32>
    %76 = arith.truncf %75 : vector<8x8xf32> to vector<8x8xbf16>
    %c0_32 = arith.constant 0 : index
    %c0_33 = arith.constant 0 : index
    %77 = vector.load %arg4[%c0_32, %c0_33] : memref<8x8xbf16, #tpu.memory_space<vmem>>, vector<8x8xbf16>
    %cst_34 = arith.constant dense<0.000000e+00> : vector<8x8xf32>
    %78 = tpu.matmul %76, %77, %cst_34 {dimension_numbers = #tpu.dot_dimension_numbers<[1], [0], [0], [1], [0, 0, 1, 1], [], []>} : vector<8x8xbf16>, vector<8x8xbf16>, vector<8x8xf32> -> vector<8x8xf32>
    %79 = tpu.concatenate %2, %3, %64 in 0 : vector<8x8xf32>, vector<8x8xf32>, vector<8x8xf32> -> vector<24x8xf32>
    %80 = arith.truncf %79 : vector<24x8xf32> to vector<24x8xbf16>
    %c0_35 = arith.constant 0 : index
    %c0_36 = arith.constant 0 : index
    %81 = vector.load %arg3[%c0_35, %c0_36] : memref<8x8xbf16, #tpu.memory_space<vmem>>, vector<8x8xbf16>
    %cst_37 = arith.constant dense<0.000000e+00> : vector<24x8xf32>
    %82 = tpu.matmul %80, %81, %cst_37 {dimension_numbers = #tpu.dot_dimension_numbers<[1], [0], [0], [1], [0, 0, 1, 1], [], []>} : vector<24x8xbf16>, vector<8x8xbf16>, vector<24x8xf32> -> vector<24x8xf32>
    %83 = vector.extract_strided_slice %82 {offsets = [0, 0], sizes = [8, 8], strides = [1, 1]} : vector<24x8xf32> to vector<8x8xf32>
    %84 = vector.extract_strided_slice %82 {offsets = [8, 0], sizes = [8, 8], strides = [1, 1]} : vector<24x8xf32> to vector<8x8xf32>
    %85 = vector.extract_strided_slice %82 {offsets = [16, 0], sizes = [8, 8], strides = [1, 1]} : vector<24x8xf32> to vector<8x8xf32>
    %86 = arith.subf %1, %78 : vector<8x8xf32>
    %87 = arith.maximumf %83, %86 : vector<8x8xf32>
    %88 = arith.minimumf %84, %87 : vector<8x8xf32>
    %89 = arith.cmpf olt, %85, %88 : vector<8x8xf32>
    %90 = arith.extui %89 : vector<8x8xi1> to vector<8x8xi32>
    %91 = arith.sitofp %90 : vector<8x8xi32> to vector<8x8xf32>
    %92 = arith.subf %88, %85 : vector<8x8xf32>
    %93 = arith.subf %84, %85 : vector<8x8xf32>
    %cst_38 = arith.constant 9.99999997E-7 : f32
    %94 = vector.broadcast %cst_38 : f32 to vector<8x8xf32>
    %95 = arith.addf %93, %94 : vector<8x8xf32>
    %96 = tpu.reciprocal %95 {approx = true} : vector<8x8xf32> -> vector<8x8xf32>
    %97 = arith.mulf %92, %96 : vector<8x8xf32>
    %98 = arith.subf %85, %88 : vector<8x8xf32>
    %99 = arith.subf %85, %83 : vector<8x8xf32>
    %cst_39 = arith.constant 9.99999997E-7 : f32
    %100 = vector.broadcast %cst_39 : f32 to vector<8x8xf32>
    %101 = arith.addf %99, %100 : vector<8x8xf32>
    %102 = tpu.reciprocal %101 {approx = true} : vector<8x8xf32> -> vector<8x8xf32>
    %103 = arith.mulf %98, %102 : vector<8x8xf32>
    %104 = tpu.concatenate %91, %97, %103 in 0 : vector<8x8xf32>, vector<8x8xf32>, vector<8x8xf32> -> vector<24x8xf32>
    %105 = arith.truncf %104 : vector<24x8xf32> to vector<24x8xbf16>
    %c0_40 = arith.constant 0 : index
    %c0_41 = arith.constant 0 : index
    %106 = vector.load %arg2[%c0_40, %c0_41] : memref<8x8xbf16, #tpu.memory_space<vmem>>, vector<8x8xbf16>
    %cst_42 = arith.constant dense<0.000000e+00> : vector<24x8xf32>
    %107 = tpu.matmul %105, %106, %cst_42 {dimension_numbers = #tpu.dot_dimension_numbers<[1], [0], [0], [1], [0, 0, 1, 1], [], []>} : vector<24x8xbf16>, vector<8x8xbf16>, vector<24x8xf32> -> vector<24x8xf32>
    %108 = vector.extract_strided_slice %107 {offsets = [0, 0], sizes = [8, 8], strides = [1, 1]} : vector<24x8xf32> to vector<8x8xf32>
    %109 = vector.extract_strided_slice %107 {offsets = [8, 0], sizes = [8, 8], strides = [1, 1]} : vector<24x8xf32> to vector<8x8xf32>
    %110 = vector.extract_strided_slice %107 {offsets = [16, 0], sizes = [8, 8], strides = [1, 1]} : vector<24x8xf32> to vector<8x8xf32>
    %cst_43 = arith.constant 0.000000e+00 : f32
    %111 = vector.broadcast %cst_43 : f32 to vector<8x8xf32>
    %112 = arith.cmpf one, %108, %111 : vector<8x8xf32>
    %cst_44 = arith.constant 1.000000e+00 : f32
    %113 = vector.broadcast %cst_44 : f32 to vector<8x8xf32>
    %114 = arith.subf %113, %109 : vector<8x8xf32>
    %115 = arith.mulf %114, %64 : vector<8x8xf32>
    %116 = arith.mulf %109, %3 : vector<8x8xf32>
    %117 = arith.addf %115, %116 : vector<8x8xf32>
    %cst_45 = arith.constant 1.000000e+00 : f32
    %118 = vector.broadcast %cst_45 : f32 to vector<8x8xf32>
    %119 = arith.subf %118, %110 : vector<8x8xf32>
    %120 = arith.mulf %119, %64 : vector<8x8xf32>
    %121 = arith.mulf %110, %2 : vector<8x8xf32>
    %122 = arith.addf %120, %121 : vector<8x8xf32>
    %123 = arith.select %112, %117, %122 : vector<8x8xi1>, vector<8x8xf32>
    %c0_46 = arith.constant 0 : index
    %c0_47 = arith.constant 0 : index
    %124 = vector.load %arg13[%c0_46, %c0_47] : memref<8x24xf32, #tpu.memory_space<vmem>>, vector<8x24xf32>
    tpu.vector_store %arg13[%c0_46, %c0_47], %53 {strides = array<i32>} : memref<8x24xf32, #tpu.memory_space<vmem>>, vector<8x24xf32>,
    %c0_48 = arith.constant 0 : index
    %c0_49 = arith.constant 0 : index
    %125 = vector.load %arg13[%c0_48, %c0_49] : memref<8x24xf32, #tpu.memory_space<vmem>>, vector<8x8xf32>
    tpu.vector_store %arg13[%c0_48, %c0_49], %123 {strides = array<i32>} : memref<8x24xf32, #tpu.memory_space<vmem>>, vector<8x8xf32>,
    %c0_50 = arith.constant 0 : index
    %c8 = arith.constant 8 : index
    %126 = vector.load %arg13[%c0_50, %c8] : memref<8x24xf32, #tpu.memory_space<vmem>>, vector<8x8xf32>
    tpu.vector_store %arg13[%c0_50, %c8], %75 {strides = array<i32>} : memref<8x24xf32, #tpu.memory_space<vmem>>, vector<8x8xf32>,
    return
  }
  func.func @transform_0(%arg0: i32) -> (i32, i32) {
    %c0_i32 = arith.constant 0 : i32
    %c0_i32_0 = arith.constant 0 : i32
    return %arg0, %c0_i32 : i32, i32
  }
  func.func @transform_1(%arg0: i32) -> (i32, i32) {
    %c0_i32 = arith.constant 0 : i32
    %c0_i32_0 = arith.constant 0 : i32
    %c0_i32_1 = arith.constant 0 : i32
    return %c0_i32, %c0_i32_0 : i32, i32
  }
  func.func @transform_2(%arg0: i32) -> (i32, i32) {
    %c0_i32 = arith.constant 0 : i32
    %c0_i32_0 = arith.constant 0 : i32
    %c0_i32_1 = arith.constant 0 : i32
    return %c0_i32, %c0_i32_0 : i32, i32
  }
  func.func @transform_3(%arg0: i32) -> (i32, i32) {
    %c0_i32 = arith.constant 0 : i32
    %c0_i32_0 = arith.constant 0 : i32
    %c0_i32_1 = arith.constant 0 : i32
    return %c0_i32, %c0_i32_0 : i32, i32
  }
  func.func @transform_4(%arg0: i32) -> (i32, i32) {
    %c0_i32 = arith.constant 0 : i32
    %c0_i32_0 = arith.constant 0 : i32
    %c0_i32_1 = arith.constant 0 : i32
    return %c0_i32, %c0_i32_0 : i32, i32
  }
  func.func @transform_5(%arg0: i32) -> (i32, i32) {
    %c0_i32 = arith.constant 0 : i32
    %c0_i32_0 = arith.constant 0 : i32
    %c0_i32_1 = arith.constant 0 : i32
    return %c0_i32, %c0_i32_0 : i32, i32
  }
  func.func @transform_6(%arg0: i32) -> (i32, i32) {
    %c0_i32 = arith.constant 0 : i32
    %c0_i32_0 = arith.constant 0 : i32
    %c0_i32_1 = arith.constant 0 : i32
    return %c0_i32, %c0_i32_0 : i32, i32
  }
  func.func @transform_7(%arg0: i32) -> (i32, i32) {
    %c0_i32 = arith.constant 0 : i32
    %c0_i32_0 = arith.constant 0 : i32
    %c0_i32_1 = arith.constant 0 : i32
    return %c0_i32, %c0_i32_0 : i32, i32
  }
  func.func @transform_8(%arg0: i32) -> (i32, i32) {
    %c0_i32 = arith.constant 0 : i32
    %c0_i32_0 = arith.constant 0 : i32
    %c0_i32_1 = arith.constant 0 : i32
    return %c0_i32, %c0_i32_0 : i32, i32
  }
  func.func @transform_9(%arg0: i32) -> (i32, i32) {
    %c0_i32 = arith.constant 0 : i32
    %c0_i32_0 = arith.constant 0 : i32
    %c0_i32_1 = arith.constant 0 : i32
    return %c0_i32, %c0_i32_0 : i32, i32
  }
  func.func @transform_10(%arg0: i32) -> (i32, i32) {
    %c0_i32 = arith.constant 0 : i32
    %c0_i32_0 = arith.constant 0 : i32
    %c0_i32_1 = arith.constant 0 : i32
    return %c0_i32, %c0_i32_0 : i32, i32
  }
  func.func @transform_11(%arg0: i32) -> (i32, i32) {
    %c0_i32 = arith.constant 0 : i32
    %c0_i32_0 = arith.constant 0 : i32
    %c0_i32_1 = arith.constant 0 : i32
    return %c0_i32, %c0_i32_0 : i32, i32
  }
  func.func @transform_12(%arg0: i32) -> (i32, i32) {
    %c0_i32 = arith.constant 0 : i32
    %c0_i32_0 = arith.constant 0 : i32
    return %arg0, %c0_i32 : i32, i32
  }
}

</mosaic_0001>

<llo_original>
// kernel: tpu_custom_call.1
$region0: #{tpu_custom_call.1}
  #allocation0 [shape = 'u32[]', space=smem, size = 0x4, offset = 0x4, fixed_abs, tag = 'smem constant byte address 0x4 - core index']
  #allocation1 [shape = 'u32[144,128]{1,0:T(1,128)}', space=vmem, size = 0x12000, scoped, tag = 'internal scratch']
  %s0 = inlined_call_operand.vmem [shape: f32[8,56], index: 0, kind: input, shape index: {}]
  %s1 = inlined_call_operand.vmem [shape: bf16[8,8], index: 1, kind: input, shape index: {}]
  %s2 = inlined_call_operand.vmem [shape: bf16[8,8], index: 2, kind: input, shape index: {}]
  %s3 = inlined_call_operand.hbm [shape: bf16[8,8], index: 3, kind: input, shape index: {}]
  %s4 = inlined_call_operand.vmem [shape: f32[1,56], index: 4, kind: input, shape index: {}]
  %s5 = inlined_call_operand.vmem [shape: f32[1,56], index: 5, kind: input, shape index: {}]
  %s6 = inlined_call_operand.hbm [shape: bf16[56,112], index: 6, kind: input, shape index: {}]
  %s7 = inlined_call_operand.hbm [shape: f32[1,112], index: 7, kind: input, shape index: {}]
  %s8 = inlined_call_operand.vmem [shape: bf16[112,112], index: 8, kind: input, shape index: {}]
  %s9 = inlined_call_operand.hbm [shape: f32[1,112], index: 9, kind: input, shape index: {}]
  %s10 = inlined_call_operand.vmem [shape: bf16[112,24], index: 10, kind: input, shape index: {}]
  %s11 = inlined_call_operand.vmem [shape: f32[1,24], index: 11, kind: input, shape index: {}]
  %s12 = inlined_call_operand.hbm [shape: f32[8,24], index: 12, kind: output, shape index: {}]
  %s13 = sld [smem:[#allocation0]]
  $region74: #{tpu_custom_call.1} parent=0
    _
  %s15 = ssub.s32 1, %s13
  %s16 = scalar_select 0, %s15, %s13
  $region1: #{tpu_custom_call.1} parent=0
    #allocation2 [shape = 'u8[2048]{0}', space=vmem, size = 0x800, scoped, tag = 'input window, operand 3, single buffered']
    #allocation3 [shape = 's32[1]{0}', space=sflag, size = 0x4, scoped, tag = 'scoped memory for tpu_custom_call.1']
    #allocation4 [shape = 's32[1]{0}', space=sflag, size = 0x4, scoped, tag = 'scoped memory for tpu_custom_call.1']
    #allocation5 [shape = 'u8[14336]{0}', space=vmem, size = 0x3800, scoped, tag = 'input window, operand 6, single buffered']
    #allocation6 [shape = 's32[1]{0}', space=sflag, size = 0x4, scoped, tag = 'scoped memory for tpu_custom_call.1']
    #allocation7 [shape = 'u8[512]{0}', space=vmem, size = 0x400, scoped, tag = 'input window, operand 7, single buffered']
    #allocation8 [shape = 'u8[512]{0}', space=vmem, size = 0x400, scoped, tag = 'input window, operand 9, single buffered']
    #allocation9 [shape = 's32[1]{0}', space=sflag, size = 0x4, scoped, tag = 'scoped memory for tpu_custom_call.1']
    #allocation10 [shape = 'u8[4096]{0}', space=vmem, size = 0x1000, scoped, tag = 'output window, operand 0, single buffered']
    %17 = vsyncpa [#allocation3], 0
    %18 = vsyncpa [#allocation6], 0
    %19 = vsyncpa [#allocation9], 0
    %20 = vsyncpa [#allocation4], 0
    // Predicated region
    $region2: #{tpu_custom_call.1} parent=1 // pred_check
      _
    $region3: #{tpu_custom_call.1} parent=1 // pred_check_branch
      %22 = sbr.rel (0) target = $region5
    $region4: #{tpu_custom_call.1} parent=1 // pred_region
      _
    $region5: #{tpu_custom_call.1} parent=1 // pred_fallthru
      _
    // Predicated region
    $region6: #{tpu_custom_call.1} parent=1 // pred_check
      _
    $region7: #{tpu_custom_call.1} parent=1 // pred_check_branch
      %24 = sbr.rel (0) target = $region9
    $region8: #{tpu_custom_call.1} parent=1 // pred_region
      _
    $region9: #{tpu_custom_call.1} parent=1 // pred_fallthru
      _
    // Predicated region
    $region10: #{tpu_custom_call.1} parent=1 // pred_check
      _
    $region11: #{tpu_custom_call.1} parent=1 // pred_check_branch
      %26 = sbr.rel (0) target = $region13
    $region12: #{tpu_custom_call.1} parent=1 // pred_region
      _
    $region13: #{tpu_custom_call.1} parent=1 // pred_fallthru
      _
    // Predicated region
    $region14: #{tpu_custom_call.1} parent=1 // pred_check
      _
    $region15: #{tpu_custom_call.1} parent=1 // pred_check_branch
      %28 = sbr.rel (0) target = $region17
    $region16: #{tpu_custom_call.1} parent=1 // pred_region
      %s30 = ssub.s32 64, 64
      %31 = vsyncadd [#allocation3], %s30
      %s33 = sshll.u32 [#allocation2], 4
      %s34 = int_to_ptr.vmem [resolvable:$true] %s33
      %36 = dma.hbm_to_vmem [thread:$0]  %s3, 64, %s34, [#allocation3]
    $region17: #{tpu_custom_call.1} parent=1 // pred_fallthru
      _
    // Predicated region
    $region18: #{tpu_custom_call.1} parent=1 // pred_check
      _
    $region19: #{tpu_custom_call.1} parent=1 // pred_check_branch
      %38 = sbr.rel (0) target = $region21
    $region20: #{tpu_custom_call.1} parent=1 // pred_region
      _
    $region21: #{tpu_custom_call.1} parent=1 // pred_fallthru
      _
    // Predicated region
    $region22: #{tpu_custom_call.1} parent=1 // pred_check
      _
    $region23: #{tpu_custom_call.1} parent=1 // pred_check_branch
      %40 = sbr.rel (0) target = $region25
    $region24: #{tpu_custom_call.1} parent=1 // pred_region
      _
    $region25: #{tpu_custom_call.1} parent=1 // pred_fallthru
      _
    // Predicated region
    $region26: #{tpu_custom_call.1} parent=1 // pred_check
      _
    $region27: #{tpu_custom_call.1} parent=1 // pred_check_branch
      %42 = sbr.rel (0) target = $region29
    $region28: #{tpu_custom_call.1} parent=1 // pred_region
      %s44 = ssub.s32 448, 448
      %45 = vsyncadd [#allocation6], %s44
      %s46 = sshll.u32 [#allocation5], 4
      %s47 = int_to_ptr.vmem [resolvable:$true] %s46
      %52 = dma.hbm_to_vmem [thread:$0]  %s6, 448, %s47, [#allocation6], 64, 64, 4
    $region29: #{tpu_custom_call.1} parent=1 // pred_fallthru
      _
    // Predicated region
    $region30: #{tpu_custom_call.1} parent=1 // pred_check
      _
    $region31: #{tpu_custom_call.1} parent=1 // pred_check_branch
      %54 = sbr.rel (0) target = $region33
    $region32: #{tpu_custom_call.1} parent=1 // pred_region
      %s56 = ssub.s32 16, 16
      %57 = vsyncadd [#allocation6], %s56
      %s59 = sshll.u32 [#allocation7], 4
      %s60 = int_to_ptr.vmem [resolvable:$true] %s59
      %62 = dma.hbm_to_vmem [thread:$0]  %s7, 16, %s60, [#allocation6]
    $region33: #{tpu_custom_call.1} parent=1 // pred_fallthru
      _
    // Predicated region
    $region34: #{tpu_custom_call.1} parent=1 // pred_check
      _
    $region35: #{tpu_custom_call.1} parent=1 // pred_check_branch
      %64 = sbr.rel (0) target = $region37
    $region36: #{tpu_custom_call.1} parent=1 // pred_region
      _
    $region37: #{tpu_custom_call.1} parent=1 // pred_fallthru
      _
    // Predicated region
    $region38: #{tpu_custom_call.1} parent=1 // pred_check
      _
    $region39: #{tpu_custom_call.1} parent=1 // pred_check_branch
      %66 = sbr.rel (0) target = $region41
    $region40: #{tpu_custom_call.1} parent=1 // pred_region
      %s68 = ssub.s32 16, 16
      %69 = vsyncadd [#allocation9], %s68
      %s71 = sshll.u32 [#allocation8], 4
      %s72 = int_to_ptr.vmem [resolvable:$true] %s71
      %74 = dma.hbm_to_vmem [thread:$0]  %s9, 16, %s72, [#allocation9]
    $region41: #{tpu_custom_call.1} parent=1 // pred_fallthru
      _
    // Predicated region
    $region42: #{tpu_custom_call.1} parent=1 // pred_check
      _
    $region43: #{tpu_custom_call.1} parent=1 // pred_check_branch
      %76 = sbr.rel (0) target = $region45
    $region44: #{tpu_custom_call.1} parent=1 // pred_region
      _
    $region45: #{tpu_custom_call.1} parent=1 // pred_fallthru
      _
    // Predicated region
    $region46: #{tpu_custom_call.1} parent=1 // pred_check
      _
    $region47: #{tpu_custom_call.1} parent=1 // pred_check_branch
      %78 = sbr.rel (0) target = $region49
    $region48: #{tpu_custom_call.1} parent=1 // pred_region
      _
    $region49: #{tpu_custom_call.1} parent=1 // pred_fallthru
      _
    // Predicated region
    $region50: #{tpu_custom_call.1} parent=1 // pred_check
      _
    $region51: #{tpu_custom_call.1} parent=1 // pred_check_branch
      %80 = sbr.rel (0) target = $region53
    $region52: #{tpu_custom_call.1} parent=1 // pred_region
      %81 = dma.done [#allocation3], 64
    $region53: #{tpu_custom_call.1} parent=1 // pred_fallthru
      _
    // Predicated region
    $region54: #{tpu_custom_call.1} parent=1 // pred_check
      _
    $region55: #{tpu_custom_call.1} parent=1 // pred_check_branch
      %83 = sbr.rel (0) target = $region57
    $region56: #{tpu_custom_call.1} parent=1 // pred_region
      %84 = dma.done [#allocation6], 448
    $region57: #{tpu_custom_call.1} parent=1 // pred_fallthru
      _
    // Predicated region
    $region58: #{tpu_custom_call.1} parent=1 // pred_check
      _
    $region59: #{tpu_custom_call.1} parent=1 // pred_check_branch
      %86 = sbr.rel (0) target = $region61
    $region60: #{tpu_custom_call.1} parent=1 // pred_region
      %87 = dma.done [#allocation6], 16
    $region61: #{tpu_custom_call.1} parent=1 // pred_fallthru
      _
    // Predicated region
    $region62: #{tpu_custom_call.1} parent=1 // pred_check
      _
    $region63: #{tpu_custom_call.1} parent=1 // pred_check_branch
      %89 = sbr.rel (0) target = $region65
    $region64: #{tpu_custom_call.1} parent=1 // pred_region
      %90 = dma.done [#allocation9], 16
    $region65: #{tpu_custom_call.1} parent=1 // pred_fallthru
      _
    %v92 = vld [vmem:[%s0] sm:$0xff]
    %vm93 = vcmask 457728
    %v94 = vsel %vm93, %v92, 0.0
    %95 = vadd.xlane.f32.xlu0 %v94
    %v96 = vpop.xlane.xlu0 %95
    %v97 = vrcp.pop 56.0
    %v98 = vmul.f32 %v96, %v97
    %v99 = vmul.f32 %v92, %v92
    %v100 = vsel %vm93, %v99, 0.0
    %101 = vadd.xlane.f32.xlu0 %v100
    %v102 = vpop.xlane.xlu0 %101
    %v103 = vmul.f32 %v102, %v97
    %v104 = vmul.f32 %v98, %v98
    %v105 = vsub.f32 %v103, %v104
    %v106 = vmax.f32 %v105, 0.0
    %v107 = vsub.f32 %v92, %v98
    %v108 = vadd.f32 %v106, 1e-05
    %v109 = vrsqrt.pop %v108
    %v110 = vmul.f32 %v107, %v109
    %v111 = vld [vmem:[%s4] sm:$0x1]
    %v113 = vlaneseq
    %v114 = vshrl.u32 %v113, 7
    %v115 = vsub.s32 0, %v114
    %v116 = vrot.slane %v111, %v115
    %v118 = vmul.f32 %v110, %v116
    %v119 = vld [vmem:[%s5] sm:$0x1]
    %v121 = vlaneseq
    %v122 = vshrl.u32 %v121, 7
    %v123 = vsub.s32 0, %v122
    %v124 = vrot.slane %v119, %v123
    %v126 = vadd.f32 %v118, %v124
    %v127 = vpack.c.bf16 %v126, %v126
    %v128 = vld [vmem:[#allocation5] sm:$0xf]
    %v129 = vld [vmem:[#allocation5 + $0x4] sm:$0xf]
    %v130 = vld [vmem:[#allocation5 + $0x8] sm:$0xf]
    %v131 = vld [vmem:[#allocation5 + $0xc] sm:$0xf]
    %v132 = vld [vmem:[#allocation5 + $0x10] sm:$0xf]
    %v133 = vld [vmem:[#allocation5 + $0x14] sm:$0xf]
    %v134 = vld [vmem:[#allocation5 + $0x18] sm:$0xf]
    %v135 = vld [vmem:[#allocation7] sm:$0x1]
    %v137 = vlaneseq
    %v138 = vshrl.u32 %v137, 7
    %v139 = vsub.s32 0, %v138
    %v140 = vrot.slane %v135, %v139
    %v149 = vunpack.c.l.b16 %v128
    %v150 = vunpack.c.l.b16 %v129
    %v151 = vunpack.c.l.b16 %v130
    %v152 = vunpack.c.l.b16 %v131
    %v153 = vunpack.c.l.b16 %v132
    %v154 = vunpack.c.l.b16 %v133
    %v155 = vunpack.c.l.b16 %v134
    %v156 = vpack.c.b16 %v150, %v149
    %v157 = vpack.c.b16 %v152, %v151
    %v158 = vpack.c.b16 %v154, %v153
    %v159 = vpack.c.b16 %v155, %v155
    %v164 = vsel %vm93, %v127, 0
    %vm166 = vcmask 1043456
    %v168 = vsel %vm166, %v159, 0
    %170 = vmatprep.subr.bf16.mxu0 0
    %171 = vmatpush1.bf16.msra.mxu0 0
    %172 = vmatprep.subr.bf16.mxu0 0
    %173 = vmatpush1.bf16.msra.mxu0 0
    %174 = vmatprep.subr.bf16.mxu0 0
    %175 = vmatpush1.bf16.msra.mxu0 0
    %176 = vmatprep.subr.bf16.mxu0 0
    %177 = vmatpush1.bf16.msra.mxu0 0
    %178 = vmatprep.subr.bf16.mxu0 0
    %179 = vmatpush1.bf16.msra.mxu0 %v168
    %180 = vmatprep.subr.bf16.mxu0 0
    %181 = vmatpush1.bf16.msra.mxu0 %v158
    %182 = vmatprep.subr.bf16.mxu0 0
    %183 = vmatpush1.bf16.msra.mxu0 %v157
    %184 = vmatprep.subr.bf16.mxu0 0
    %185 = vmatpush1.bf16.msra.mxu0 %v156
    %186 = vmatprep.subr.bf16.mxu0 0
    %187 = vmatpush2.bf16.msra.mxu0 0
    %188 = vmatprep.subr.bf16.mxu0 0
    %189 = vmatpush2.bf16.msra.mxu0 0
    %190 = vmatprep.subr.bf16.mxu0 0
    %191 = vmatpush2.bf16.msra.mxu0 0
    %192 = vmatprep.subr.bf16.mxu0 0
    %193 = vmatpush2.bf16.msra.mxu0 0
    %194 = vmatprep.subr.bf16.mxu0 0
    %195 = vmatpush2.bf16.msra.mxu0 0
    %196 = vmatprep.subr.bf16.mxu0 0
    %197 = vmatpush2.bf16.msra.mxu0 0
    %198 = vmatprep.subr.bf16.mxu0 0
    %199 = vmatpush2.bf16.msra.mxu0 0
    %200 = vmatprep.subr.bf16.mxu0 0
    %201 = vmatpush2.bf16.msra.mxu0 0
    %202 = vmatprep.mubr.bf16.mxu0 0
    %203 = vmatmul.mubr.bf16.gmra.mxu0 %v164
    %v204 = vpop.f32.mrf.mxu0
    %v205 = vadd.f32 %v140, %v204
    %v206 = vpop.f32.mrf.mxu0
    %v207 = vpop.f32.mrf.mxu0
    %v208 = vpop.f32.mrf.mxu0
    %209 = vdwg.mxu0
    %v210 = vmax.f32 %v205, 0.0
    %v211 = vpack.c.bf16 %v210, %v210
    %v212 = vld [vmem:[%s8] sm:$0xf]
    %v213 = vld [vmem:[%s8 + $0x4] sm:$0xf]
    %v214 = vld [vmem:[%s8 + $0x8] sm:$0xf]
    %v215 = vld [vmem:[%s8 + $0xc] sm:$0xf]
    %v216 = vld [vmem:[%s8 + $0x10] sm:$0xf]
    %v217 = vld [vmem:[%s8 + $0x14] sm:$0xf]
    %v218 = vld [vmem:[%s8 + $0x18] sm:$0xf]
    %v219 = vld [vmem:[%s8 + $0x1c] sm:$0xf]
    %v220 = vld [vmem:[%s8 + $0x20] sm:$0xf]
    %v221 = vld [vmem:[%s8 + $0x24] sm:$0xf]
    %v222 = vld [vmem:[%s8 + $0x28] sm:$0xf]
    %v223 = vld [vmem:[%s8 + $0x2c] sm:$0xf]
    %v224 = vld [vmem:[%s8 + $0x30] sm:$0xf]
    %v225 = vld [vmem:[%s8 + $0x34] sm:$0xf]
    %v226 = vld [vmem:[#allocation8] sm:$0x1]
    %v228 = vlaneseq
    %v229 = vshrl.u32 %v228, 7
    %v230 = vsub.s32 0, %v229
    %v231 = vrot.slane %v226, %v230
    %v247 = vunpack.c.l.b16 %v212
    %v248 = vunpack.c.l.b16 %v213
    %v249 = vunpack.c.l.b16 %v214
    %v250 = vunpack.c.l.b16 %v215
    %v251 = vunpack.c.l.b16 %v216
    %v252 = vunpack.c.l.b16 %v217
    %v253 = vunpack.c.l.b16 %v218
    %v254 = vunpack.c.l.b16 %v219
    %v255 = vunpack.c.l.b16 %v220
    %v256 = vunpack.c.l.b16 %v221
    %v257 = vunpack.c.l.b16 %v222
    %v258 = vunpack.c.l.b16 %v223
    %v259 = vunpack.c.l.b16 %v224
    %v260 = vunpack.c.l.b16 %v225
    %v261 = vpack.c.b16 %v248, %v247
    %v262 = vpack.c.b16 %v250, %v249
    %v263 = vpack.c.b16 %v252, %v251
    %v264 = vpack.c.b16 %v254, %v253
    %v265 = vpack.c.b16 %v256, %v255
    %v266 = vpack.c.b16 %v258, %v257
    %v267 = vpack.c.b16 %v260, %v259
    %vm275 = vcmask 916480
    %v277 = vsel %vm275, %v211, 0
    %279 = vmatprep.subr.bf16.mxu0 0
    %280 = vmatpush1.bf16.msra.mxu0 0
    %281 = vmatprep.subr.bf16.mxu0 0
    %282 = vmatpush1.bf16.msra.mxu0 %v267
    %283 = vmatprep.subr.bf16.mxu0 0
    %284 = vmatpush1.bf16.msra.mxu0 %v266
    %285 = vmatprep.subr.bf16.mxu0 0
    %286 = vmatpush1.bf16.msra.mxu0 %v265
    %287 = vmatprep.subr.bf16.mxu0 0
    %288 = vmatpush1.bf16.msra.mxu0 %v264
    %289 = vmatprep.subr.bf16.mxu0 0
    %290 = vmatpush1.bf16.msra.mxu0 %v263
    %291 = vmatprep.subr.bf16.mxu0 0
    %292 = vmatpush1.bf16.msra.mxu0 %v262
    %293 = vmatprep.subr.bf16.mxu0 0
    %294 = vmatpush1.bf16.msra.mxu0 %v261
    %295 = vmatprep.subr.bf16.mxu0 0
    %296 = vmatpush2.bf16.msra.mxu0 0
    %297 = vmatprep.subr.bf16.mxu0 0
    %298 = vmatpush2.bf16.msra.mxu0 0
    %299 = vmatprep.subr.bf16.mxu0 0
    %300 = vmatpush2.bf16.msra.mxu0 0
    %301 = vmatprep.subr.bf16.mxu0 0
    %302 = vmatpush2.bf16.msra.mxu0 0
    %303 = vmatprep.subr.bf16.mxu0 0
    %304 = vmatpush2.bf16.msra.mxu0 0
    %305 = vmatprep.subr.bf16.mxu0 0
    %306 = vmatpush2.bf16.msra.mxu0 0
    %307 = vmatprep.subr.bf16.mxu0 0
    %308 = vmatpush2.bf16.msra.mxu0 0
    %309 = vmatprep.subr.bf16.mxu0 0
    %310 = vmatpush2.bf16.msra.mxu0 0
    %311 = vmatprep.mubr.bf16.mxu0 0
    %312 = vmatmul.mubr.bf16.gmra.mxu0 %v277
    %v313 = vpop.f32.mrf.mxu0
    %v314 = vadd.f32 %v231, %v313
    %v315 = vpop.f32.mrf.mxu0
    %v316 = vpop.f32.mrf.mxu0
    %v317 = vpop.f32.mrf.mxu0
    %318 = vdwg.mxu0
    %v319 = vmax.f32 %v314, 0.0
    %v320 = vpack.c.bf16 %v319, %v319
    %v321 = vld [vmem:[%s10] sm:$0xf]
    %v322 = vld [vmem:[%s10 + $0x4] sm:$0xf]
    %v323 = vld [vmem:[%s10 + $0x8] sm:$0xf]
    %v324 = vld [vmem:[%s10 + $0xc] sm:$0xf]
    %v325 = vld [vmem:[%s10 + $0x10] sm:$0xf]
    %v326 = vld [vmem:[%s10 + $0x14] sm:$0xf]
    %v327 = vld [vmem:[%s10 + $0x18] sm:$0xf]
    %v328 = vld [vmem:[%s10 + $0x1c] sm:$0xf]
    %v329 = vld [vmem:[%s10 + $0x20] sm:$0xf]
    %v330 = vld [vmem:[%s10 + $0x24] sm:$0xf]
    %v331 = vld [vmem:[%s10 + $0x28] sm:$0xf]
    %v332 = vld [vmem:[%s10 + $0x2c] sm:$0xf]
    %v333 = vld [vmem:[%s10 + $0x30] sm:$0xf]
    %v334 = vld [vmem:[%s10 + $0x34] sm:$0xf]
    %v335 = vld [vmem:[%s11] sm:$0x1]
    %v337 = vlaneseq
    %v338 = vshrl.u32 %v337, 7
    %v339 = vsub.s32 0, %v338
    %v340 = vrot.slane %v335, %v339
    %v356 = vunpack.c.l.b16 %v321
    %v357 = vunpack.c.l.b16 %v322
    %v358 = vunpack.c.l.b16 %v323
    %v359 = vunpack.c.l.b16 %v324
    %v360 = vunpack.c.l.b16 %v325
    %v361 = vunpack.c.l.b16 %v326
    %v362 = vunpack.c.l.b16 %v327
    %v363 = vunpack.c.l.b16 %v328
    %v364 = vunpack.c.l.b16 %v329
    %v365 = vunpack.c.l.b16 %v330
    %v366 = vunpack.c.l.b16 %v331
    %v367 = vunpack.c.l.b16 %v332
    %v368 = vunpack.c.l.b16 %v333
    %v369 = vunpack.c.l.b16 %v334
    %v370 = vpack.c.b16 %v357, %v356
    %v371 = vpack.c.b16 %v359, %v358
    %v372 = vpack.c.b16 %v361, %v360
    %v373 = vpack.c.b16 %v363, %v362
    %v374 = vpack.c.b16 %v365, %v364
    %v375 = vpack.c.b16 %v367, %v366
    %v376 = vpack.c.b16 %v369, %v368
    %v385 = vsel %vm275, %v320, 0
    %387 = vmatprep.subr.bf16.mxu0 0
    %388 = vmatpush1.bf16.msra.mxu0 0
    %389 = vmatprep.subr.bf16.mxu0 0
    %390 = vmatpush1.bf16.msra.mxu0 %v376
    %391 = vmatprep.subr.bf16.mxu0 0
    %392 = vmatpush1.bf16.msra.mxu0 %v375
    %393 = vmatprep.subr.bf16.mxu0 0
    %394 = vmatpush1.bf16.msra.mxu0 %v374
    %395 = vmatprep.subr.bf16.mxu0 0
    %396 = vmatpush1.bf16.msra.mxu0 %v373
    %397 = vmatprep.subr.bf16.mxu0 0
    %398 = vmatpush1.bf16.msra.mxu0 %v372
    %399 = vmatprep.subr.bf16.mxu0 0
    %400 = vmatpush1.bf16.msra.mxu0 %v371
    %401 = vmatprep.subr.bf16.mxu0 0
    %402 = vmatpush1.bf16.msra.mxu0 %v370
    %403 = vmatprep.subr.bf16.mxu0 0
    %404 = vmatpush2.bf16.msra.mxu0 0
    %405 = vmatprep.subr.bf16.mxu0 0
    %406 = vmatpush2.bf16.msra.mxu0 0
    %407 = vmatprep.subr.bf16.mxu0 0
    %408 = vmatpush2.bf16.msra.mxu0 0
    %409 = vmatprep.subr.bf16.mxu0 0
    %410 = vmatpush2.bf16.msra.mxu0 0
    %411 = vmatprep.subr.bf16.mxu0 0
    %412 = vmatpush2.bf16.msra.mxu0 0
    %413 = vmatprep.subr.bf16.mxu0 0
    %414 = vmatpush2.bf16.msra.mxu0 0
    %415 = vmatprep.subr.bf16.mxu0 0
    %416 = vmatpush2.bf16.msra.mxu0 0
    %417 = vmatprep.subr.bf16.mxu0 0
    %418 = vmatpush2.bf16.msra.mxu0 0
    %419 = vmatprep.mubr.bf16.mxu0 0
    %420 = vmatmul.mubr.bf16.gmra.mxu0 %v385
    %v421 = vpop.f32.mrf.mxu0
    %v422 = vadd.f32 %v340, %v421
    %v423 = vpop.f32.mrf.mxu0
    %v424 = vpop.f32.mrf.mxu0
    %v425 = vpop.f32.mrf.mxu0
    %426 = vdwg.mxu0
    %428 = vrot.lane.b32.xlu0 %v92, 8
    %v429 = vpop.permute.xlu0 %428
    %v431 = vsub.f32 %v92, %v429
    %v432 = vsub.f32 0.0, %v422
    %v433 = vmul.f32 %v432, 1.442695
    %v434 = vpow.pop %v433
    %v435 = vadd.f32 %v434, 1.0
    %v436 = vrcp.pop %v435
    %438 = vrot.lane.b32.xlu0 %v436, 16
    %v439 = vpop.permute.xlu0 %438
    %v441 = vmul.f32 %v431, %v439
    %443 = vrot.lane.b32.xlu0 %v441, 120
    %v444 = vpop.permute.xlu0 %443
    %v446 = vadd.f32 %v92, %v444
    %v447 = vsub.f32 0.0, %v92
    %449 = vrot.lane.b32.xlu0 %v447, 8
    %v450 = vpop.permute.xlu0 %449
    %v452 = vsub.f32 %v92, %v450
    %453 = vrot.lane.b32.xlu0 %v436, 24
    %v454 = vpop.permute.xlu0 %453
    %v456 = vmul.f32 %v452, %v454
    %458 = vrot.lane.b32.xlu0 %v456, 120
    %v459 = vpop.permute.xlu0 %458
    %v461 = vadd.f32 %v447, %v459
    %v462 = vpack.c.bf16 %v461, %v461
    %v463 = vld [vmem:[#allocation2] sm:$0xf]
    %465 = vrot.lane.b32.xlu0 %v462, 104
    %v466 = vpop.permute.xlu0 %465
    %vm467 = vcmask 64512
    %v469 = vsel %vm467, %v466, 0
    %v472 = vsel %vm166, %v463, 0
    %474 = vmatprep.subr.bf16.mxu0 0
    %475 = vmatpush1.bf16.msra.mxu0 0
    %476 = vmatprep.subr.bf16.mxu0 0
    %477 = vmatpush1.bf16.msra.mxu0 0
    %478 = vmatprep.subr.bf16.mxu0 0
    %479 = vmatpush1.bf16.msra.mxu0 0
    %480 = vmatprep.subr.bf16.mxu0 0
    %481 = vmatpush1.bf16.msra.mxu0 0
    %482 = vmatprep.subr.bf16.mxu0 0
    %483 = vmatpush1.bf16.msra.mxu0 0
    %484 = vmatprep.subr.bf16.mxu0 0
    %485 = vmatpush1.bf16.msra.mxu0 0
    %486 = vmatprep.subr.bf16.mxu0 0
    %487 = vmatpush1.bf16.msra.mxu0 0
    %488 = vmatprep.subr.bf16.mxu0 0
    %489 = vmatpush1.bf16.msra.mxu0 %v472
    %490 = vmatprep.subr.bf16.mxu0 0
    %491 = vmatpush2.bf16.msra.mxu0 0
    %492 = vmatprep.subr.bf16.mxu0 0
    %493 = vmatpush2.bf16.msra.mxu0 0
    %494 = vmatprep.subr.bf16.mxu0 0
    %495 = vmatpush2.bf16.msra.mxu0 0
    %496 = vmatprep.subr.bf16.mxu0 0
    %497 = vmatpush2.bf16.msra.mxu0 0
    %498 = vmatprep.subr.bf16.mxu0 0
    %499 = vmatpush2.bf16.msra.mxu0 0
    %500 = vmatprep.subr.bf16.mxu0 0
    %501 = vmatpush2.bf16.msra.mxu0 0
    %502 = vmatprep.subr.bf16.mxu0 0
    %503 = vmatpush2.bf16.msra.mxu0 0
    %504 = vmatprep.subr.bf16.mxu0 0
    %505 = vmatpush2.bf16.msra.mxu0 0
    %506 = vmatprep.mubr.bf16.mxu0 0
    %507 = vmatmul.mubr.bf16.gmra.mxu0 %v469
    %v508 = vpop.f32.mrf.mxu0
    %v509 = vadd.f32 0.0, %v508
    %v510 = vpop.f32.mrf.mxu0
    %v511 = vpop.f32.mrf.mxu0
    %v512 = vpop.f32.mrf.mxu0
    %513 = vdwg.mxu0
    %514 = vrot.lane.b32.xlu0 %v92, 120
    %v515 = vpop.permute.xlu0 %514
    %v517 = vpack.c.bf16 %v515, %v92
    %v518 = vpack.c.bf16 %v446, %v446
    %v519 = vld [vmem:[%s2] sm:$0xf]
    %522 = vrot.lane.b32.xlu0 %v517, 120
    %v523 = vpop.permute.xlu0 %522
    %524 = vrot.lane.b32.xlu0 %v518, 120
    %v525 = vpop.permute.xlu0 %524
    %v527 = vsel %vm467, %v523, 0
    %v530 = vsel %vm467, %v525, 0
    %v533 = vsel %vm166, %v519, 0
    %535 = vmatprep.subr.bf16.mxu0 0
    %536 = vmatpush1.bf16.msra.mxu0 0
    %537 = vmatprep.subr.bf16.mxu0 0
    %538 = vmatpush1.bf16.msra.mxu0 0
    %539 = vmatprep.subr.bf16.mxu0 0
    %540 = vmatpush1.bf16.msra.mxu0 0
    %541 = vmatprep.subr.bf16.mxu0 0
    %542 = vmatpush1.bf16.msra.mxu0 0
    %543 = vmatprep.subr.bf16.mxu0 0
    %544 = vmatpush1.bf16.msra.mxu0 0
    %545 = vmatprep.subr.bf16.mxu0 0
    %546 = vmatpush1.bf16.msra.mxu0 0
    %547 = vmatprep.subr.bf16.mxu0 0
    %548 = vmatpush1.bf16.msra.mxu0 0
    %549 = vmatprep.subr.bf16.mxu0 0
    %550 = vmatpush1.bf16.msra.mxu0 %v533
    %551 = vmatprep.subr.bf16.mxu0 0
    %552 = vmatpush2.bf16.msra.mxu0 0
    %553 = vmatprep.subr.bf16.mxu0 0
    %554 = vmatpush2.bf16.msra.mxu0 0
    %555 = vmatprep.subr.bf16.mxu0 0
    %556 = vmatpush2.bf16.msra.mxu0 0
    %557 = vmatprep.subr.bf16.mxu0 0
    %558 = vmatpush2.bf16.msra.mxu0 0
    %559 = vmatprep.subr.bf16.mxu0 0
    %560 = vmatpush2.bf16.msra.mxu0 0
    %561 = vmatprep.subr.bf16.mxu0 0
    %562 = vmatpush2.bf16.msra.mxu0 0
    %563 = vmatprep.subr.bf16.mxu0 0
    %564 = vmatpush2.bf16.msra.mxu0 0
    %565 = vmatprep.subr.bf16.mxu0 0
    %566 = vmatpush2.bf16.msra.mxu0 0
    %567 = vmatprep.mubr.bf16.mxu0 0
    %568 = vmatmul.mubr.bf16.gmra.mxu0 %v527
    %v569 = vpop.f32.mrf.mxu0
    %v570 = vadd.f32 0.0, %v569
    %v571 = vpop.f32.mrf.mxu0
    %v572 = vpop.f32.mrf.mxu0
    %v573 = vadd.f32 0.0, %v572
    %v574 = vpop.f32.mrf.mxu0
    %575 = vmatprep.mubr.bf16.mxu0 0
    %576 = vmatmul.mubr.bf16.gmra.mxu0 %v530
    %v577 = vpop.f32.mrf.mxu0
    %v578 = vadd.f32 0.0, %v577
    %v579 = vpop.f32.mrf.mxu0
    %v580 = vpop.f32.mrf.mxu0
    %v581 = vpop.f32.mrf.mxu0
    %582 = vdwg.mxu0
    %v583 = vsub.f32 %v92, %v509
    %v584 = vmax.f32 %v570, %v583
    %v585 = vmin.f32 %v573, %v584
    %vm586 = vcmp.lt.f32.partialorder %v578, %v585
    %v587 = vsel %vm586, 1, 0
    %v588 = vcvt.s32.f32 %v587
    %v589 = vsub.f32 %v585, %v578
    %v590 = vsub.f32 %v573, %v578
    %v591 = vadd.f32 %v590, 1e-06
    %v592 = vrcp.pop %v591
    %v593 = vmul.f32 %v589, %v592
    %v594 = vsub.f32 %v578, %v585
    %v595 = vsub.f32 %v578, %v570
    %v596 = vadd.f32 %v595, 1e-06
    %v597 = vrcp.pop %v596
    %v598 = vmul.f32 %v594, %v597
    %v599 = vpack.c.bf16 %v593, %v588
    %v600 = vpack.c.bf16 %v598, %v598
    %v601 = vld [vmem:[%s1] sm:$0xf]
    %v603 = vsel %vm467, %v599, 0
    %v606 = vsel %vm467, %v600, 0
    %v609 = vsel %vm166, %v601, 0
    %611 = vmatprep.subr.bf16.mxu0 0
    %612 = vmatpush1.bf16.msra.mxu0 0
    %613 = vmatprep.subr.bf16.mxu0 0
    %614 = vmatpush1.bf16.msra.mxu0 0
    %615 = vmatprep.subr.bf16.mxu0 0
    %616 = vmatpush1.bf16.msra.mxu0 0
    %617 = vmatprep.subr.bf16.mxu0 0
    %618 = vmatpush1.bf16.msra.mxu0 0
    %619 = vmatprep.subr.bf16.mxu0 0
    %620 = vmatpush1.bf16.msra.mxu0 0
    %621 = vmatprep.subr.bf16.mxu0 0
    %622 = vmatpush1.bf16.msra.mxu0 0
    %623 = vmatprep.subr.bf16.mxu0 0
    %624 = vmatpush1.bf16.msra.mxu0 0
    %625 = vmatprep.subr.bf16.mxu0 0
    %626 = vmatpush1.bf16.msra.mxu0 %v609
    %627 = vmatprep.subr.bf16.mxu0 0
    %628 = vmatpush2.bf16.msra.mxu0 0
    %629 = vmatprep.subr.bf16.mxu0 0
    %630 = vmatpush2.bf16.msra.mxu0 0
    %631 = vmatprep.subr.bf16.mxu0 0
    %632 = vmatpush2.bf16.msra.mxu0 0
    %633 = vmatprep.subr.bf16.mxu0 0
    %634 = vmatpush2.bf16.msra.mxu0 0
    %635 = vmatprep.subr.bf16.mxu0 0
    %636 = vmatpush2.bf16.msra.mxu0 0
    %637 = vmatprep.subr.bf16.mxu0 0
    %638 = vmatpush2.bf16.msra.mxu0 0
    %639 = vmatprep.subr.bf16.mxu0 0
    %640 = vmatpush2.bf16.msra.mxu0 0
    %641 = vmatprep.subr.bf16.mxu0 0
    %642 = vmatpush2.bf16.msra.mxu0 0
    %643 = vmatprep.mubr.bf16.mxu0 0
    %644 = vmatmul.mubr.bf16.gmra.mxu0 %v603
    %v645 = vpop.f32.mrf.mxu0
    %v646 = vadd.f32 0.0, %v645
    %v647 = vpop.f32.mrf.mxu0
    %v648 = vpop.f32.mrf.mxu0
    %v649 = vadd.f32 0.0, %v648
    %v650 = vpop.f32.mrf.mxu0
    %651 = vmatprep.mubr.bf16.mxu0 0
    %652 = vmatmul.mubr.bf16.gmra.mxu0 %v606
    %v653 = vpop.f32.mrf.mxu0
    %v654 = vadd.f32 0.0, %v653
    %v655 = vpop.f32.mrf.mxu0
    %v656 = vpop.f32.mrf.mxu0
    %v657 = vpop.f32.mrf.mxu0
    %658 = vdwg.mxu0
    %vm659 = vcmp.ne.f32.partialorder %v646, 0.0
    %v660 = vsub.f32 1.0, %v649
    %662 = vrot.lane.b32.xlu0 %v446, 120
    %v663 = vpop.permute.xlu0 %662
    %v665 = vmul.f32 %v660, %v663
    %666 = vrot.lane.b32.xlu0 %v92, 112
    %v667 = vpop.permute.xlu0 %666
    %v669 = vmul.f32 %v649, %v667
    %v670 = vadd.f32 %v665, %v669
    %v671 = vsub.f32 1.0, %v654
    %v672 = vmul.f32 %v671, %v663
    %v673 = vmul.f32 %v654, %v515
    %v674 = vadd.f32 %v672, %v673
    %v675 = vsel %vm659, %v670, %v674
    %vm676 = vcmask 195584
    %677 = vst.msk [vmem:[#allocation10] sm:$0xff] %vm676, %v422
    %678 = vst.msk [vmem:[#allocation10] sm:$0xff] %vm467, %v675
    %680 = vrot.lane.b32.xlu0 %v461, 112
    %v681 = vpop.permute.xlu0 %680
    %vm683 = vcmask 130112
    %684 = vst.msk [vmem:[#allocation10] sm:$0xff] %vm683, %v681
    // Predicated region
    $region66: #{tpu_custom_call.1} parent=1 // pred_check
      _
    $region67: #{tpu_custom_call.1} parent=1 // pred_check_branch
      %686 = sbr.rel (0) target = $region69
    $region68: #{tpu_custom_call.1} parent=1 // pred_region
      %s688 = ssub.s32 128, 128
      %689 = vsyncadd [#allocation4], %s688
      %s691 = sshll.u32 [#allocation10], 4
      %s692 = int_to_ptr.vmem [resolvable:$true] %s691
      %694 = dma.vmem_to_hbm [thread:$0]  %s692, 128, %s12, [#allocation4]
    $region69: #{tpu_custom_call.1} parent=1 // pred_fallthru
      _
    // Predicated region
    $region70: #{tpu_custom_call.1} parent=1 // pred_check
      _
    $region71: #{tpu_custom_call.1} parent=1 // pred_check_branch
      %696 = sbr.rel (0) target = $region73
    $region72: #{tpu_custom_call.1} parent=1 // pred_region
      %697 = dma.done [#allocation4], 128
    $region73: #{tpu_custom_call.1} parent=1 // pred_fallthru
      _
    %698 = vsyncpa [#allocation3], 1
    %699 = vsyncpa [#allocation6], 1
    %700 = vsyncpa [#allocation9], 1
    %701 = vsyncpa [#allocation4], 1

</llo_original>
